<compile_context>
chip_gen: v7x
topology: tpu7x:2x2x1
jax: 0.10.0
libtpu: 0.0.40
codegen_flags: <defaults>
</compile_context>

<pallas_src>
import functools
import math

import jax
import jax.numpy as jnp
from jax.experimental import pallas as pl
from jax.experimental.pallas import tpu as pltpu


def _channel_attn_kernel(x_ref, w1t_ref, w2t_ref, o_ref, *, hw):
    # x_ref / o_ref: (bt, C, hw) float32 block for the current grid step.
    # w1t_ref: (C, mid), w2t_ref: (mid, C)  (pre-transposed in the wrapper).
    bt = x_ref.shape[0]
    inv_hw = 1.0 / hw

    # Global average / max pool over the lane (spatial) axis.  x_ref is read
    # per use so the whole block is never held live across the kernel.
    avg = jnp.sum(x_ref[...], axis=-1) * inv_hw          # (bt, C)
    mx = jnp.max(x_ref[...], axis=-1)                    # (bt, C)

    # Fused avg/max FC: stack along the sublane axis -> one batched matmul
    # chain (2 MXU pushes per grid step total).
    pooled = jnp.concatenate([avg, mx], axis=0)          # (2*bt, C)
    h = jnp.maximum(
        jnp.dot(pooled, w1t_ref[...], preferred_element_type=jnp.float32),
        0.0)                                             # (2*bt, mid)
    o = jnp.dot(h, w2t_ref[...], preferred_element_type=jnp.float32)  # (2*bt, C)
    attn = jax.nn.sigmoid(o[:bt] + o[bt:])               # (bt, C)

    # Single bulk lane-dense store of the whole block.
    o_ref[...] = x_ref[...] * attn[:, :, None]


def _pick_block_batch(B, C, hw, vmem_budget_bytes=4 << 20):
    """Largest divisor of B whose (bt, C, hw) block fits ~4 MiB, preferring
    >= 4 grid steps (>= 2 per TensorCore on v7x) when B allows."""
    bytes_per_elem = C * hw * 4
    max_by_mem = max(1, vmem_budget_bytes // max(bytes_per_elem, 1))
    if B >= 4:
        cap = B // 4
    elif B >= 2:
        cap = B // 2
    else:
        cap = 1
    cap = max(1, min(cap, max_by_mem, B))
    for bt in range(cap, 0, -1):
        if B % bt == 0:
            return bt
    return 1


def lightweight_channel_attention(x, w1, w2):
    """x: (B, C, H, W) float32; w1: (mid, C); w2: (C, mid)."""
    B, C, H, W = x.shape
    mid = w1.shape[0]
    hw = H * W

    # No-copy reshape to a lane-dense layout; NO padding, NO trailing slice.
    x_flat = x.reshape(B, C, hw)
    # Pre-transpose the tiny weights once in the wrapper (avoids in-kernel
    # transposes); negligible HBM cost.
    w1t = w1.T                                           # (C, mid)
    w2t = w2.T                                           # (mid, C)

    bt = _pick_block_batch(B, C, hw)
    grid = (B // bt,)
    # TODO(synk): if a single (1, C, hw) block cannot fit VMEM (threshold ~2x
    # lower on v7x, 64 MiB), a two-pass scheme tiled over HW would be needed;
    # do not tile HW otherwise (grid axes are a serial loop per TensorCore).

    kernel = functools.partial(_channel_attn_kernel, hw=hw)

    # Advisory cost: the op is HBM-bandwidth bound (read x + write out).
    cost = pl.CostEstimate(
        flops=B * (8 * C * mid + 3 * C * hw),
        transcendentals=B * C,
        bytes_accessed=2 * B * C * hw * 4 + 2 * C * mid * 4,
    )

    out_flat = pl.pallas_call(
        kernel,
        out_shape=jax.ShapeDtypeStruct((B, C, hw), jnp.float32),
        grid_spec=pltpu.PrefetchScalarGridSpec(
            num_scalar_prefetch=0,
            grid=grid,
            in_specs=[
                # Full-extent (C, hw) trailing dims: legal regardless of
                # hw % 128, so no pad / slice passes are ever needed.
                pl.BlockSpec((bt, C, hw), lambda i: (i, 0, 0)),
                pl.BlockSpec((C, mid), lambda i: (0, 0)),
                pl.BlockSpec((mid, C), lambda i: (0, 0)),
            ],
            out_specs=pl.BlockSpec((bt, C, hw), lambda i: (i, 0, 0)),
        ),
        compiler_params=pltpu.CompilerParams(
            dimension_semantics=("parallel",),
            vmem_limit_bytes=40 << 20,
        ),
        cost_estimate=cost,
    )(x_flat, w1t, w2t)

    return out_flat.reshape(B, C, H, W)


def _reference(x, w1, w2):
    # Pure-JAX reference matching the PyTorch forward.
    avg = jnp.mean(x, axis=(2, 3), keepdims=True)          # (B,C,1,1)
    mx = jnp.max(x, axis=(2, 3), keepdims=True)            # (B,C,1,1)

    def fc(p):  # p: (B,C,1,1)
        p = p[..., 0, 0]                                    # (B,C)
        h = jnp.maximum(p @ w1.T, 0.0)                      # (B,mid)
        o = h @ w2.T                                        # (B,C)
        return o[..., None, None]

    out = fc(avg) + fc(mx)
    return x * jax.nn.sigmoid(out)


if __name__ == "__main__":
    B, C, H, W = 2, 16, 16, 16
    reduction = 8
    mid = max(C // reduction, 8)

    key = jax.random.PRNGKey(0)
    kx, k1, k2 = jax.random.split(key, 3)

    x = jax.random.normal(kx, (B, C, H, W), dtype=jnp.float32)
    # Deterministic Kaiming-uniform-like init for the two bias-free 1x1 convs.
    bound1 = 1.0 / math.sqrt(C)
    bound2 = 1.0 / math.sqrt(mid)
    w1 = jax.random.uniform(k1, (mid, C), jnp.float32, -bound1, bound1)
    w2 = jax.random.uniform(k2, (C, mid), jnp.float32, -bound2, bound2)

    out = lightweight_channel_attention(x, w1, w2)
    out = jax.block_until_ready(out)

    ref = _reference(x, w1, w2)
    assert out.shape == (B, C, H, W)
    assert jnp.allclose(out, ref, atol=1e-5, rtol=1e-5), "mismatch vs reference"

    print("KERNEL_OK")
</pallas_src>

<mosaic_0001>
module attributes {stable_mosaic.version = 11 : i64} {
  func.func @_channel_attn_kernel(%arg0: i32, %arg1: memref<1x16x256xf32, #tpu.memory_space<vmem>>, %arg2: memref<16x8xf32, #tpu.memory_space<vmem>>, %arg3: memref<8x16xf32, #tpu.memory_space<vmem>>, %arg4: memref<1x16x256xf32, #tpu.memory_space<vmem>>) attributes {dimension_semantics = [#tpu.dimension_semantics<parallel>], iteration_bounds = array<i64: 2>, scalar_prefetch = 0 : i64, scratch_operands = 0 : i64, tpu.core_type = #tpu.core_type<tc>, window_params = [{transform_indices = @transform_0, window_bounds = array<i64: 1, 16, 256>}, {pipeline_mode = #tpu.pipeline_mode<synchronous>, transform_indices = @transform_1, window_bounds = array<i64: 16, 8>}, {pipeline_mode = #tpu.pipeline_mode<synchronous>, transform_indices = @transform_2, window_bounds = array<i64: 8, 16>}, {transform_indices = @transform_3, window_bounds = array<i64: 1, 16, 256>}]} {
    %c0 = arith.constant 0 : index
    %c0_0 = arith.constant 0 : index
    %c0_1 = arith.constant 0 : index
    %0 = vector.load %arg1[%c0, %c0_0, %c0_1] : memref<1x16x256xf32, #tpu.memory_space<vmem>>, vector<1x16x256xf32>
    %cst = arith.constant dense<0.000000e+00> : vector<1x16xf32>
    %1 = vector.multi_reduction <add>, %0, %cst [2] : vector<1x16x256xf32> to vector<1x16xf32>
    %cst_2 = arith.constant 3.906250e-03 : f32
    %2 = vector.broadcast %cst_2 : f32 to vector<1x16xf32>
    %3 = arith.mulf %1, %2 : vector<1x16xf32>
    %c0_3 = arith.constant 0 : index
    %c0_4 = arith.constant 0 : index
    %c0_5 = arith.constant 0 : index
    %4 = vector.load %arg1[%c0_3, %c0_4, %c0_5] : memref<1x16x256xf32, #tpu.memory_space<vmem>>, vector<1x16x256xf32>
    %cst_6 = arith.constant dense<0xFF800000> : vector<1x16xf32>
    %5 = vector.multi_reduction <maximumf>, %4, %cst_6 [2] : vector<1x16x256xf32> to vector<1x16xf32>
    %6 = tpu.concatenate %3, %5 in 0 : vector<1x16xf32>, vector<1x16xf32> -> vector<2x16xf32>
    %c0_7 = arith.constant 0 : index
    %c0_8 = arith.constant 0 : index
    %7 = vector.load %arg2[%c0_7, %c0_8] : memref<16x8xf32, #tpu.memory_space<vmem>>, vector<16x8xf32>
    %cst_9 = arith.constant dense<0.000000e+00> : vector<2x8xf32>
    %8 = tpu.matmul %6, %7, %cst_9 {dimension_numbers = #tpu.dot_dimension_numbers<[1], [0], [0], [1], [0, 0, 1, 1], [], []>} : vector<2x16xf32>, vector<16x8xf32>, vector<2x8xf32> -> vector<2x8xf32>
    %cst_10 = arith.constant 0.000000e+00 : f32
    %9 = vector.broadcast %cst_10 : f32 to vector<2x8xf32>
    %10 = arith.maximumf %8, %9 : vector<2x8xf32>
    %c0_11 = arith.constant 0 : index
    %c0_12 = arith.constant 0 : index
    %11 = vector.load %arg3[%c0_11, %c0_12] : memref<8x16xf32, #tpu.memory_space<vmem>>, vector<8x16xf32>
    %cst_13 = arith.constant dense<0.000000e+00> : vector<2x16xf32>
    %12 = tpu.matmul %10, %11, %cst_13 {dimension_numbers = #tpu.dot_dimension_numbers<[1], [0], [0], [1], [0, 0, 1, 1], [], []>} : vector<2x8xf32>, vector<8x16xf32>, vector<2x16xf32> -> vector<2x16xf32>
    %13 = vector.extract_strided_slice %12 {offsets = [0, 0], sizes = [1, 16], strides = [1, 1]} : vector<2x16xf32> to vector<1x16xf32>
    %14 = vector.extract_strided_slice %12 {offsets = [1, 0], sizes = [1, 16], strides = [1, 1]} : vector<2x16xf32> to vector<1x16xf32>
    %15 = arith.addf %13, %14 : vector<1x16xf32>
    %16 = arith.negf %15 : vector<1x16xf32>
    %17 = math.exp %16 : vector<1x16xf32>
    %cst_14 = arith.constant 1.000000e+00 : f32
    %18 = vector.broadcast %cst_14 : f32 to vector<1x16xf32>
    %19 = arith.addf %18, %17 : vector<1x16xf32>
    %20 = arith.divf %18, %19 : vector<1x16xf32>
    %c0_15 = arith.constant 0 : index
    %c0_16 = arith.constant 0 : index
    %c0_17 = arith.constant 0 : index
    %21 = vector.load %arg1[%c0_15, %c0_16, %c0_17] : memref<1x16x256xf32, #tpu.memory_space<vmem>>, vector<1x16x256xf32>
    %22 = vector.shape_cast %20 : vector<1x16xf32> to vector<1x16x1xf32>
    %23 = vector.broadcast %22 : vector<1x16x1xf32> to vector<1x16x256xf32>
    %24 = arith.mulf %21, %23 : vector<1x16x256xf32>
    %c0_18 = arith.constant 0 : index
    %c0_19 = arith.constant 0 : index
    %c0_20 = arith.constant 0 : index
    %25 = vector.load %arg4[%c0_18, %c0_19, %c0_20] : memref<1x16x256xf32, #tpu.memory_space<vmem>>, vector<1x16x256xf32>
    tpu.vector_store %arg4[%c0_18, %c0_19, %c0_20], %24 {strides = array<i32>} : memref<1x16x256xf32, #tpu.memory_space<vmem>>, vector<1x16x256xf32>,
    return
  }
  func.func @transform_0(%arg0: i32) -> (i32, i32, i32) {
    %c0_i32 = arith.constant 0 : i32
    %c0_i32_0 = arith.constant 0 : i32
    %c0_i32_1 = arith.constant 0 : i32
    return %arg0, %c0_i32, %c0_i32_0 : i32, i32, i32
  }
  func.func @transform_1(%arg0: i32) -> (i32, i32) {
    %c0_i32 = arith.constant 0 : i32
    %c0_i32_0 = arith.constant 0 : i32
    %c0_i32_1 = arith.constant 0 : i32
    return %c0_i32, %c0_i32_0 : i32, i32
  }
  func.func @transform_2(%arg0: i32) -> (i32, i32) {
    %c0_i32 = arith.constant 0 : i32
    %c0_i32_0 = arith.constant 0 : i32
    %c0_i32_1 = arith.constant 0 : i32
    return %c0_i32, %c0_i32_0 : i32, i32
  }
  func.func @transform_3(%arg0: i32) -> (i32, i32, i32) {
    %c0_i32 = arith.constant 0 : i32
    %c0_i32_0 = arith.constant 0 : i32
    %c0_i32_1 = arith.constant 0 : i32
    return %arg0, %c0_i32, %c0_i32_0 : i32, i32, i32
  }
}

</mosaic_0001>

<llo_original>
// kernel: tpu_custom_call.1
$region0: #{tpu_custom_call.1}
  #allocation0 [shape = 'u32[]', space=smem, size = 0x4, offset = 0x4, fixed_abs, tag = 'smem constant byte address 0x4 - core index']
  #allocation1 [shape = 'u32[144,128]{1,0:T(1,128)}', space=vmem, size = 0x12000, scoped, tag = 'internal scratch']
  %s0 = inlined_call_operand.hbm [shape: f32[2,16,256], index: 0, kind: input, shape index: {}]
  %s1 = inlined_call_operand.vmem [shape: f32[16,8], index: 1, kind: input, shape index: {}]
  %s2 = inlined_call_operand.vmem [shape: f32[8,16], index: 2, kind: input, shape index: {}]
  %s3 = inlined_call_operand.hbm [shape: f32[2,16,256], index: 3, kind: output, shape index: {}]
  %s4 = sld [smem:[#allocation0]]
  $region49: #{tpu_custom_call.1} parent=0
    _
  %s6 = ssub.s32 1, %s4
  %s7 = scalar_select 0, %s6, %s4
  $region1: #{tpu_custom_call.1} parent=0
    #allocation2 [shape = 'u8[32768]{0}', space=vmem, size = 0x8000, scoped, tag = 'input window, operand 0']
    #allocation3 [shape = 's32[2]{0}', space=sflag, size = 0x8, scoped, tag = 'scoped memory for tpu_custom_call.1']
    #allocation4 [shape = 's32[2]{0}', space=sflag, size = 0x8, scoped, tag = 'scoped memory for tpu_custom_call.1']
    #allocation5 [shape = 'u8[32768]{0}', space=vmem, size = 0x8000, scoped, tag = 'output window, operand 0']
    %8 = vsyncpa [#allocation3], 0
    %s9 = scalar_lea.sflag [#allocation3], 1
    %10 = vsyncpa %s9, 0
    %11 = vsyncpa [#allocation4], 0
    %s12 = scalar_lea.sflag [#allocation4], 1
    %13 = vsyncpa %s12, 0
    loop: start=0, step=1, limit=4
    $region2: #{tpu_custom_call.1} parent=1 // loop_pre_header
      _
    $region3: #{tpu_custom_call.1} parent=1 // loop_header
      %s15 = sphi 0, %s19
      %p16 = scmp.ge.s32.totalorder %s15, 4
      %s25 = sphi 0, %s27
      %s28 = sphi 0, %s25
      %s29 = sphi 0, %s28
      %s45 = sphi 0, %s29
      %s49 = sphi 0, %s49
      %s51 = sphi 0, %s49
      %s52 = sphi 0, %s51
      %s66 = sphi 0, %s52
      %s70 = sphi 0, %s70
      %s72 = sphi 0, %s70
      %s73 = sphi 0, %s72
      %s87 = sphi 0, %s73
      %s93 = sphi 0, %s95
      %s96 = sphi 0, %s93
      %s97 = sphi 0, %s96
      %s113 = sphi 0, %s97
    $region4: #{tpu_custom_call.1} parent=1 // loop_header_branch
      %18 = sbr.rel (%p16) target = $region8
    $region5: #{tpu_custom_call.1} parent=1 // loop_body
      %s20 = ssub.s32 %s15, 1
      %s21 = ssub.s32 %s15, 2
      %s22 = sadd.s32 %s15, 1
      %s23 = ssub.s32 %s15, %s22
      %p24 = scmp.eq.s32.totalorder %s23, 0
      %s26 = sadd.s32 %s25, 1
      %s27 = scalar_select %p24, %s25, %s26
      %p30 = pneg %p24
      %p31 = scmp.eq.s32.totalorder %s15, 1
      %p32 = por %p30, %p31
      %p33 = scmp.ne.s32.totalorder %s25, %s28
      %p34 = scmp.eq.s32.totalorder %s15, 0
      %p35 = por %p33, %p34
      %p36 = scmp.ne.s32.totalorder %s25, %s28
      %p37 = scmp.eq.s32.totalorder %s20, 1
      %p38 = por %p36, %p37
      %p39 = scmp.ne.s32.totalorder %s28, %s29
      %p40 = scmp.eq.s32.totalorder %s20, 0
      %p41 = por %p39, %p40
      %p42 = scmp.ne.s32.totalorder %s28, %s29
      %p43 = scmp.eq.s32.totalorder %s21, 1
      %p44 = por %p42, %p43
      %p46 = scmp.ne.s32.totalorder %s29, %s45
      %p47 = scmp.eq.s32.totalorder %s21, 0
      %p48 = por %p46, %p47
      %s50 = sadd.s32 %s49, 1
      %p53 = scmp.eq.s32.totalorder %s15, 1
      %p54 = scmp.ne.s32.totalorder %s49, %s51
      %p55 = scmp.eq.s32.totalorder %s15, 0
      %p56 = por %p54, %p55
      %p57 = scmp.ne.s32.totalorder %s49, %s51
      %p58 = scmp.eq.s32.totalorder %s20, 1
      %p59 = por %p57, %p58
      %p60 = scmp.ne.s32.totalorder %s51, %s52
      %p61 = scmp.eq.s32.totalorder %s20, 0
      %p62 = por %p60, %p61
      %p63 = scmp.ne.s32.totalorder %s51, %s52
      %p64 = scmp.eq.s32.totalorder %s21, 1
      %p65 = por %p63, %p64
      %p67 = scmp.ne.s32.totalorder %s52, %s66
      %p68 = scmp.eq.s32.totalorder %s21, 0
      %p69 = por %p67, %p68
      %s71 = sadd.s32 %s70, 1
      %p74 = scmp.eq.s32.totalorder %s15, 1
      %p75 = scmp.ne.s32.totalorder %s70, %s72
      %p76 = scmp.eq.s32.totalorder %s15, 0
      %p77 = por %p75, %p76
      %p78 = scmp.ne.s32.totalorder %s70, %s72
      %p79 = scmp.eq.s32.totalorder %s20, 1
      %p80 = por %p78, %p79
      %p81 = scmp.ne.s32.totalorder %s72, %s73
      %p82 = scmp.eq.s32.totalorder %s20, 0
      %p83 = por %p81, %p82
      %p84 = scmp.ne.s32.totalorder %s72, %s73
      %p85 = scmp.eq.s32.totalorder %s21, 1
      %p86 = por %p84, %p85
      %p88 = scmp.ne.s32.totalorder %s73, %s87
      %p89 = scmp.eq.s32.totalorder %s21, 0
      %p90 = por %p88, %p89
      %s91 = ssub.s32 %s15, %s22
      %p92 = scmp.eq.s32.totalorder %s91, 0
      %s94 = sadd.s32 %s93, 1
      %s95 = scalar_select %p92, %s93, %s94
      %p98 = pneg %p92
      %p99 = scmp.eq.s32.totalorder %s15, 1
      %p100 = por %p98, %p99
      %p101 = scmp.ne.s32.totalorder %s93, %s96
      %p102 = scmp.eq.s32.totalorder %s15, 0
      %p103 = por %p101, %p102
      %p104 = scmp.ne.s32.totalorder %s93, %s96
      %p105 = scmp.eq.s32.totalorder %s20, 1
      %p106 = por %p104, %p105
      %p107 = scmp.ne.s32.totalorder %s96, %s97
      %p108 = scmp.eq.s32.totalorder %s20, 0
      %p109 = por %p107, %p108
      %p110 = scmp.ne.s32.totalorder %s96, %s97
      %p111 = scmp.eq.s32.totalorder %s21, 1
      %p112 = por %p110, %p111
      %p114 = scmp.ne.s32.totalorder %s97, %s113
      %p115 = scmp.eq.s32.totalorder %s21, 0
      %p116 = por %p114, %p115
      %p117 = scmp.le.s32.totalorder 1, %s15
      %p118 = scmp.lt.s32.totalorder %s15, 3
      %p119 = pnand %p117, %p118
      %p120 = pneg %p119
      // Predicated region
      $region9: #{tpu_custom_call.1} parent=5 // pred_check
        _
      $region10: #{tpu_custom_call.1} parent=5 // pred_check_branch
        %122 = sbr.rel (%p119) target = $region12
      $region11: #{tpu_custom_call.1} parent=5 // pred_region
        %s123 = ssub.s32 %s15, 1
        // Predicated region
        $region13: #{tpu_custom_call.1} parent=11 // pred_check
          %p124 = pneg %p62
        $region14: #{tpu_custom_call.1} parent=11 // pred_check_branch
          %126 = sbr.rel (%p124) target = $region16
        $region15: #{tpu_custom_call.1} parent=11 // pred_region
          _
        $region16: #{tpu_custom_call.1} parent=11 // pred_fallthru
          _
        // Predicated region
        $region17: #{tpu_custom_call.1} parent=11 // pred_check
          %p127 = pneg %p83
        $region18: #{tpu_custom_call.1} parent=11 // pred_check_branch
          %129 = sbr.rel (%p127) target = $region20
        $region19: #{tpu_custom_call.1} parent=11 // pred_region
          _
        $region20: #{tpu_custom_call.1} parent=11 // pred_fallthru
          _
      $region12: #{tpu_custom_call.1} parent=5 // pred_fallthru
        _
      %p130 = scmp.lt.s32.totalorder %s15, 2
      // Predicated region
      $region21: #{tpu_custom_call.1} parent=5 // pred_check
        %p131 = pneg %p130
      $region22: #{tpu_custom_call.1} parent=5 // pred_check_branch
        %133 = sbr.rel (%p131) target = $region24
      $region23: #{tpu_custom_call.1} parent=5 // pred_region
        // Predicated region
        $region25: #{tpu_custom_call.1} parent=23 // pred_check
          %p134 = pneg %p35
        $region26: #{tpu_custom_call.1} parent=23 // pred_check_branch
          %136 = sbr.rel (%p134) target = $region28
        $region27: #{tpu_custom_call.1} parent=23 // pred_region
          %s137 = sand.u32 %s25, 1
          %s138 = scalar_lea.sflag [#allocation3], %s137
          %s139 = sand.u32 %s25, 1
          %s140 = smul.addr %s139, 32
          %s141 = scalar_lea.vmem [#allocation2], %s140
          %s143 = ssub.s32 512, 512
          %144 = vsyncadd %s138, %s143
          %s145 = smul.addr %s15, 4
          %s146 = smul.addr %s145, 128
          %s147 = scalar_lea.hbm %s0, %s146
          %s148 = sshll.u32 %s141, 4
          %s149 = int_to_ptr.vmem [resolvable:$true] %s148
          %154 = dma.hbm_to_vmem [thread:$0]  %s147, 512, %s149, %s138, 256, 256, 16
        $region28: #{tpu_custom_call.1} parent=23 // pred_fallthru
          _
      $region24: #{tpu_custom_call.1} parent=5 // pred_fallthru
        _
      %p155 = scmp.le.s32.totalorder 1, %s15
      %p156 = scmp.lt.s32.totalorder %s15, 3
      %p157 = pnand %p155, %p156
      %p158 = pneg %p157
      // Predicated region
      $region29: #{tpu_custom_call.1} parent=5 // pred_check
        _
      $region30: #{tpu_custom_call.1} parent=5 // pred_check_branch
        %160 = sbr.rel (%p157) target = $region32
      $region31: #{tpu_custom_call.1} parent=5 // pred_region
        %s161 = ssub.s32 %s15, 1
        %s162 = sand.u32 %s28, 1
        %s163 = scalar_lea.sflag [#allocation3], %s162
        %s164 = sand.u32 %s28, 1
        %s165 = smul.addr %s164, 32
        %s166 = scalar_lea.vmem [#allocation2], %s165
        // Predicated region
        $region33: #{tpu_custom_call.1} parent=31 // pred_check
          %p167 = pneg %p41
        $region34: #{tpu_custom_call.1} parent=31 // pred_check_branch
          %169 = sbr.rel (%p167) target = $region36
        $region35: #{tpu_custom_call.1} parent=31 // pred_region
          %170 = dma.done %s163, 512
        $region36: #{tpu_custom_call.1} parent=31 // pred_fallthru
          _
        %s171 = sand.u32 %s28, 1
        %s172 = scalar_lea.sflag [#allocation3], %s171
        %s173 = sand.u32 %s28, 1
        %s174 = smul.addr %s173, 32
        %s175 = scalar_lea.vmem [#allocation2], %s174
        %p176 = pneg %p41
        %p177 = pneg %p38
        %p178 = pneg %p62
        %p179 = pneg %p59
        %p180 = pneg %p83
        %p181 = pneg %p80
        %p182 = pneg %p109
        %p183 = pneg %p106
        %s184 = sand.u32 %s96, 1
        %s185 = scalar_lea.sflag [#allocation4], %s184
        %s186 = sand.u32 %s96, 1
        %s187 = smul.addr %s186, 32
        %s188 = scalar_lea.vmem [#allocation5], %s187
        %v189 = vld [vmem:[%s166] sm:$0xff]
        %v190 = vld [vmem:[%s166 + $0x8] sm:$0xff]
        %v191 = vld [vmem:[%s166 + $0x10] sm:$0xff]
        %v192 = vld [vmem:[%s166 + $0x18] sm:$0xff]
        %v193 = vadd.f32 %v189, %v190
        %194 = vadd.xlane.f32.xlu0 %v193
        %v195 = vpop.xlane.xlu0 %194
        %v196 = vadd.f32 %v191, %v192
        %197 = vadd.xlane.f32.xlu0 %v196
        %v198 = vpop.xlane.xlu0 %197
        %v199 = vmul.f32 %v195, 0.00390625
        %v200 = vmul.f32 %v198, 0.00390625
        %v201 = vmax.f32 %v189, %v190
        %202 = vmax.xlane.f32.xlu0 %v201
        %v203 = vpop.xlane.xlu0 %202
        %v204 = vmax.f32 %v191, %v192
        %205 = vmax.xlane.f32.xlu0 %v204
        %v206 = vpop.xlane.xlu0 %205
        %v209 = vlaneseq
        %v210 = vand.u32 %v209, 127
        %v211 = vlaneseq
        %v212 = vshrl.u32 %v211, 7
        %v213 = vsub.s32 %v210, %v212
        %v214 = vrot.slane %v199, %v213
        %v215 = vadd.s32 %v210, 4294967288
        %v216 = vlaneseq
        %v217 = vshrl.u32 %v216, 7
        %v218 = vsub.s32 %v215, %v217
        %v219 = vrot.slane %v200, %v218
        %vm220 = vcmask 130112
        %v221 = vsel %vm220, %v219, %v214
        %v225 = vlaneseq
        %v226 = vshrl.u32 %v225, 7
        %v227 = vsub.s32 %v210, %v226
        %v228 = vrot.slane %v203, %v227
        %v229 = vlaneseq
        %v230 = vshrl.u32 %v229, 7
        %v231 = vsub.s32 %v215, %v230
        %v232 = vrot.slane %v206, %v231
        %v233 = vsel %vm220, %v232, %v228
        %vm235 = vcmask 1040384
        %v236 = vsel %vm235, %v221, %v233
        %v237 = vld [vmem:[%s1] sm:$0xff]
        %v238 = vld [vmem:[%s1 + $0x8] sm:$0xff]
        %vm239 = vcmask 130048
        %v241 = vsel %vm239, %v236, 0
        %243 = vmatprep.subr.mxu0 0.0
        %244 = vmatpush1.msra.mxu0 %v237
        %245 = vmatprep.subr.mxu0 0.0
        %246 = vmatpush1.msra.mxu0 %v238
        %247 = vmatprep.subr.mxu0 0.0
        %248 = vmatpush1.msra.mxu0 0.0
        %249 = vmatprep.subr.mxu0 0.0
        %250 = vmatpush1.msra.mxu0 0.0
        %251 = vmatprep.subr.mxu0 0.0
        %252 = vmatpush1.msra.mxu0 0.0
        %253 = vmatprep.subr.mxu0 0.0
        %254 = vmatpush1.msra.mxu0 0.0
        %255 = vmatprep.subr.mxu0 0.0
        %256 = vmatpush1.msra.mxu0 0.0
        %257 = vmatprep.subr.mxu0 0.0
        %258 = vmatpush1.msra.mxu0 0.0
        %259 = vmatprep.subr.mxu0 0.0
        %260 = vmatpush1.msra.mxu0 0.0
        %261 = vmatprep.subr.mxu0 0.0
        %262 = vmatpush1.msra.mxu0 0.0
        %263 = vmatprep.subr.mxu0 0.0
        %264 = vmatpush1.msra.mxu0 0.0
        %265 = vmatprep.subr.mxu0 0.0
        %266 = vmatpush1.msra.mxu0 0.0
        %267 = vmatprep.subr.mxu0 0.0
        %268 = vmatpush1.msra.mxu0 0.0
        %269 = vmatprep.subr.mxu0 0.0
        %270 = vmatpush1.msra.mxu0 0.0
        %271 = vmatprep.subr.mxu0 0.0
        %272 = vmatpush1.msra.mxu0 0.0
        %273 = vmatprep.subr.mxu0 0.0
        %274 = vmatpush1.msra.mxu0 0.0
        %275 = vmatprep.subr.mxu0 0.0
        %276 = vmatpush1.msra.mxu0 0.0
        %277 = vmatprep.subr.mxu0 0.0
        %278 = vmatpush1.msra.mxu0 0.0
        %279 = vmatprep.subr.mxu0 0.0
        %280 = vmatpush1.msra.mxu0 0.0
        %281 = vmatprep.subr.mxu0 0.0
        %282 = vmatpush1.msra.mxu0 0.0
        %283 = vmatprep.subr.mxu0 0.0
        %284 = vmatpush1.msra.mxu0 0.0
        %285 = vmatprep.subr.mxu0 0.0
        %286 = vmatpush1.msra.mxu0 0.0
        %287 = vmatprep.subr.mxu0 0.0
        %288 = vmatpush1.msra.mxu0 0.0
        %289 = vmatprep.subr.mxu0 0.0
        %290 = vmatpush1.msra.mxu0 0.0
        %291 = vmatprep.subr.mxu0 0.0
        %292 = vmatpush1.msra.mxu0 0.0
        %293 = vmatprep.subr.mxu0 0.0
        %294 = vmatpush1.msra.mxu0 0.0
        %295 = vmatprep.subr.mxu0 0.0
        %296 = vmatpush1.msra.mxu0 0.0
        %297 = vmatprep.subr.mxu0 0.0
        %298 = vmatpush1.msra.mxu0 0.0
        %299 = vmatprep.subr.mxu0 0.0
        %300 = vmatpush1.msra.mxu0 0.0
        %301 = vmatprep.subr.mxu0 0.0
        %302 = vmatpush1.msra.mxu0 0.0
        %303 = vmatprep.subr.mxu0 0.0
        %304 = vmatpush1.msra.mxu0 0.0
        %305 = vmatprep.subr.mxu0 0.0
        %306 = vmatpush1.msra.mxu0 0.0
        %307 = vmatprep.mubr.f32.mxu0 0.0
        %308 = vmatmul.mubr.f32.gmra.mrb[0].mxu0 %v241
        %v309 = vpop.f32.mrb[0].mxu0
        %v310 = vadd.f32 0.0, %v309
        %v311 = vpop.f32.mrb[0].mxu0
        %312 = vdwg.mxu0
        %v313 = vmax.f32 %v310, 0.0
        %v314 = vld [vmem:[%s2] sm:$0xff]
        %vm315 = vcmask 64512
        %v317 = vsel %vm315, %v313, 0
        %319 = vmatprep.subr.mxu0 0.0
        %320 = vmatpush1.msra.mxu0 %v314
        %321 = vmatprep.subr.mxu0 0.0
        %322 = vmatpush1.msra.mxu0 0.0
        %323 = vmatprep.subr.mxu0 0.0
        %324 = vmatpush1.msra.mxu0 0.0
        %325 = vmatprep.subr.mxu0 0.0
        %326 = vmatpush1.msra.mxu0 0.0
        %327 = vmatprep.subr.mxu0 0.0
        %328 = vmatpush1.msra.mxu0 0.0
        %329 = vmatprep.subr.mxu0 0.0
        %330 = vmatpush1.msra.mxu0 0.0
        %331 = vmatprep.subr.mxu0 0.0
        %332 = vmatpush1.msra.mxu0 0.0
        %333 = vmatprep.subr.mxu0 0.0
        %334 = vmatpush1.msra.mxu0 0.0
        %335 = vmatprep.subr.mxu0 0.0
        %336 = vmatpush1.msra.mxu0 0.0
        %337 = vmatprep.subr.mxu0 0.0
        %338 = vmatpush1.msra.mxu0 0.0
        %339 = vmatprep.subr.mxu0 0.0
        %340 = vmatpush1.msra.mxu0 0.0
        %341 = vmatprep.subr.mxu0 0.0
        %342 = vmatpush1.msra.mxu0 0.0
        %343 = vmatprep.subr.mxu0 0.0
        %344 = vmatpush1.msra.mxu0 0.0
        %345 = vmatprep.subr.mxu0 0.0
        %346 = vmatpush1.msra.mxu0 0.0
        %347 = vmatprep.subr.mxu0 0.0
        %348 = vmatpush1.msra.mxu0 0.0
        %349 = vmatprep.subr.mxu0 0.0
        %350 = vmatpush1.msra.mxu0 0.0
        %351 = vmatprep.subr.mxu0 0.0
        %352 = vmatpush1.msra.mxu0 0.0
        %353 = vmatprep.subr.mxu0 0.0
        %354 = vmatpush1.msra.mxu0 0.0
        %355 = vmatprep.subr.mxu0 0.0
        %356 = vmatpush1.msra.mxu0 0.0
        %357 = vmatprep.subr.mxu0 0.0
        %358 = vmatpush1.msra.mxu0 0.0
        %359 = vmatprep.subr.mxu0 0.0
        %360 = vmatpush1.msra.mxu0 0.0
        %361 = vmatprep.subr.mxu0 0.0
        %362 = vmatpush1.msra.mxu0 0.0
        %363 = vmatprep.subr.mxu0 0.0
        %364 = vmatpush1.msra.mxu0 0.0
        %365 = vmatprep.subr.mxu0 0.0
        %366 = vmatpush1.msra.mxu0 0.0
        %367 = vmatprep.subr.mxu0 0.0
        %368 = vmatpush1.msra.mxu0 0.0
        %369 = vmatprep.subr.mxu0 0.0
        %370 = vmatpush1.msra.mxu0 0.0
        %371 = vmatprep.subr.mxu0 0.0
        %372 = vmatpush1.msra.mxu0 0.0
        %373 = vmatprep.subr.mxu0 0.0
        %374 = vmatpush1.msra.mxu0 0.0
        %375 = vmatprep.subr.mxu0 0.0
        %376 = vmatpush1.msra.mxu0 0.0
        %377 = vmatprep.subr.mxu0 0.0
        %378 = vmatpush1.msra.mxu0 0.0
        %379 = vmatprep.subr.mxu0 0.0
        %380 = vmatpush1.msra.mxu0 0.0
        %381 = vmatprep.subr.mxu0 0.0
        %382 = vmatpush1.msra.mxu0 0.0
        %383 = vmatprep.mubr.f32.mxu0 0.0
        %384 = vmatmul.mubr.f32.gmra.mrb[0].mxu0 %v317
        %v385 = vpop.f32.mrb[0].mxu0
        %v386 = vadd.f32 0.0, %v385
        %v387 = vpop.f32.mrb[0].mxu0
        %388 = vdwg.mxu0
        %v390 = vrot.slane %v386, 1
        %v392 = vadd.f32 %v386, %v390
        %v393 = vxor.u32 %v392, 2147483648
        %v394 = vmul.f32 %v393, 1.442695
        %v395 = vpow.pop %v394
        %v396 = vadd.f32 %v395, 1.0
        %v397 = vrcp.pop %v396
        %v398 = vmul.f32 1.0, %v397
        %v399 = vlaneseq
        %v400 = vshrl.u32 %v399, 7
        %v401 = vsub.s32 0, %v400
        %v402 = vrot.slane %v398, %v401
        %404 = vbcast.lane.b32.xlu0 %v402, 256
        %v405 = vpop.permute.xlu0 %404
        %s407 = sor.u32 256, 8
        %408 = vbcast.lane.b32.xlu0 %v402, %s407
        %v409 = vpop.permute.xlu0 %408
        %v410 = vmul.f32 %v189, %v405
        %v411 = vmul.f32 %v190, %v405
        %v412 = vmul.f32 %v191, %v409
        %v413 = vmul.f32 %v192, %v409
        %414 = vst [vmem:[%s188] sm:$0xff] %v410
        %415 = vst [vmem:[%s188 + $0x8] sm:$0xff] %v411
        %416 = vst [vmem:[%s188 + $0x10] sm:$0xff] %v412
        %417 = vst [vmem:[%s188 + $0x18] sm:$0xff] %v413
        %s418 = sand.u32 %s96, 1
        %s419 = scalar_lea.sflag [#allocation4], %s418
        %s420 = sand.u32 %s96, 1
        %s421 = smul.addr %s420, 32
        %s422 = scalar_lea.vmem [#allocation5], %s421
        // Predicated region
        $region37: #{tpu_custom_call.1} parent=31 // pred_check
          %p423 = pneg %p106
        $region38: #{tpu_custom_call.1} parent=31 // pred_check_branch
          %425 = sbr.rel (%p423) target = $region40
        $region39: #{tpu_custom_call.1} parent=31 // pred_region
          %s427 = ssub.s32 512, 512
          %428 = vsyncadd %s419, %s427
          %s429 = smul.addr %s20, 4
          %s430 = smul.addr %s429, 128
          %s431 = scalar_lea.hbm %s3, %s430
          %s432 = sshll.u32 %s422, 4
          %s433 = int_to_ptr.vmem [resolvable:$true] %s432
          %438 = dma.vmem_to_hbm [thread:$0]  %s433, 512, %s431, %s419, 256, 256, 16
        $region40: #{tpu_custom_call.1} parent=31 // pred_fallthru
          _
      $region32: #{tpu_custom_call.1} parent=5 // pred_fallthru
        _
      %p439 = scmp.le.s32.totalorder 2, %s15
      // Predicated region
      $region41: #{tpu_custom_call.1} parent=5 // pred_check
        %p440 = pneg %p439
      $region42: #{tpu_custom_call.1} parent=5 // pred_check_branch
        %442 = sbr.rel (%p440) target = $region44
      $region43: #{tpu_custom_call.1} parent=5 // pred_region
        %s443 = ssub.s32 %s15, 2
        // Predicated region
        $region45: #{tpu_custom_call.1} parent=43 // pred_check
          %p444 = pneg %p112
        $region46: #{tpu_custom_call.1} parent=43 // pred_check_branch
          %446 = sbr.rel (%p444) target = $region48
        $region47: #{tpu_custom_call.1} parent=43 // pred_region
          %s447 = sand.u32 %s97, 1
          %s448 = scalar_lea.sflag [#allocation4], %s447
          %s449 = sand.u32 %s97, 1
          %s450 = smul.addr %s449, 32
          %s451 = scalar_lea.vmem [#allocation5], %s450
          %452 = dma.done %s448, 512
        $region48: #{tpu_custom_call.1} parent=43 // pred_fallthru
          _
      $region44: #{tpu_custom_call.1} parent=5 // pred_fallthru
        _
    $region6: #{tpu_custom_call.1} parent=1 // loop_footer
      %s19 = sadd.s32 1, %s15
    $region7: #{tpu_custom_call.1} parent=1 // loop_footer_branch
      %14 = sbr.rel target = $region3
    $region8: #{tpu_custom_call.1} parent=1 // loop_exit
      _
    %453 = vsyncpa [#allocation3], 1
    %s454 = scalar_lea.sflag [#allocation3], 1
    %455 = vsyncpa %s454, 1
    %456 = vsyncpa [#allocation4], 1
    %s457 = scalar_lea.sflag [#allocation4], 1
    %458 = vsyncpa %s457, 1

</llo_original>
